<compile_context>
chip_gen: v6e
topology: v6e:2x2x1
jax: 0.10.0
libtpu: 0.0.40
codegen_flags: <defaults>
</compile_context>

<pallas_src>
import functools

import jax
import jax.numpy as jnp
from jax.experimental import pallas as pl
from jax.experimental.pallas import tpu as pltpu

_HIDDEN = 64


def _mlp_kernel(x_ref,
                w1_ref, b1_ref,
                w2_ref, b2_ref,
                w3_ref, b3_ref,
                w4_ref, b4_ref,
                o_ref):
    """One batch tile through the whole 4-layer MLP, fused in VMEM.

    Matmul operands are in the compute dtype (bf16 by default); accumulation,
    bias-add and ReLU stay in f32.
    """
    h = jnp.dot(x_ref[...], w1_ref[...],
                preferred_element_type=jnp.float32) + b1_ref[...]
    h = jnp.maximum(h, 0.0)
    h = jnp.dot(h.astype(w2_ref.dtype), w2_ref[...],
                preferred_element_type=jnp.float32) + b2_ref[...]
    h = jnp.maximum(h, 0.0)
    h = jnp.dot(h.astype(w3_ref.dtype), w3_ref[...],
                preferred_element_type=jnp.float32) + b3_ref[...]
    h = jnp.maximum(h, 0.0)
    out = jnp.dot(h.astype(w4_ref.dtype), w4_ref[...],
                  preferred_element_type=jnp.float32) + b4_ref[...]
    o_ref[...] = out.astype(o_ref.dtype)


def _round_up(x, m):
    return ((x + m - 1) // m) * m


def _pick_batch_tile(batch, feats, itemsize):
    """Bounded batch tile: multiple of 8, >=2 grid steps for large batches,
    capped so the double-buffered state block stays within ~16 MiB."""
    if batch <= 256:
        return _round_up(batch, 8)
    tile = min(1024, _round_up(pl.cdiv(batch, 2), 8))
    max_rows = (16 << 20) // max(1, 2 * feats * itemsize)
    max_rows = max(8, (max_rows // 8) * 8)
    return max(8, min(tile, max_rows))


def one_hot_value_network(state, params, *, batch_tile=None,
                          compute_dtype=jnp.bfloat16,
                          vmem_limit_bytes=None):
    """OneHotValueNetwork forward pass with a single fused Pallas kernel.

    state:  (B, F) array (any float dtype; cast to `compute_dtype` for matmuls)
    params: dict with w1..w4 stored as (in, out) and b1..b4 as (1, out), f32
    returns (B, 1) float32
    """
    B, F = state.shape
    itemsize = jnp.dtype(compute_dtype).itemsize

    if batch_tile is None:
        batch_tile = _pick_batch_tile(B, F, itemsize)
    assert batch_tile >= 8 and batch_tile % 8 == 0, (
        "batch_tile must be a positive multiple of 8 (sublane constraint)")

    B_pad = _round_up(B, batch_tile)
    x = state.astype(compute_dtype)
    if B_pad != B:
        x = jnp.pad(x, ((0, B_pad - B), (0, 0)))

    w = [params[f"w{i}"].astype(compute_dtype) for i in (1, 2, 3, 4)]
    b = [params[f"b{i}"].astype(jnp.float32) for i in (1, 2, 3, 4)]

    grid = (B_pad // batch_tile,)

    def whole(arr):
        nd = arr.ndim
        return pl.BlockSpec(arr.shape, lambda *_: (0,) * nd)

    # VMEM budget: double-buffered state block + (bt,1) output block (lane
    # padded in VMEM) + f32 activation temporaries + resident weights + slack.
    param_elems = F * _HIDDEN + 2 * _HIDDEN * _HIDDEN + _HIDDEN
    vmem_need = (
        2 * batch_tile * F * itemsize
        + 2 * batch_tile * 128 * 4
        + 6 * batch_tile * _HIDDEN * 4
        + 2 * param_elems * itemsize + 8 * _HIDDEN * 4
        + (4 << 20)
    )
    if vmem_limit_bytes is None and vmem_need > (30 << 20):
        vmem_limit_bytes = min(_round_up(vmem_need, 1 << 20), 100 << 20)

    out = pl.pallas_call(
        _mlp_kernel,
        out_shape=jax.ShapeDtypeStruct((B_pad, 1), jnp.float32),
        grid_spec=pltpu.PrefetchScalarGridSpec(
            num_scalar_prefetch=0,
            grid=grid,
            in_specs=[
                pl.BlockSpec((batch_tile, F), lambda i: (i, 0)),  # state tile
                whole(w[0]), whole(b[0]),
                whole(w[1]), whole(b[1]),
                whole(w[2]), whole(b[2]),
                whole(w[3]), whole(b[3]),
            ],
            out_specs=pl.BlockSpec((batch_tile, 1), lambda i: (i, 0)),
        ),
        compiler_params=pltpu.CompilerParams(
            dimension_semantics=("parallel",),
            vmem_limit_bytes=vmem_limit_bytes,
        ),
    )(x, w[0], b[0], w[1], b[1], w[2], b[2], w[3], b[3])

    return out[:B]


def init_params(num_inputs, key):
    """Deterministic init mimicking PyTorch's default Linear init:
    U(-1/sqrt(fan_in), 1/sqrt(fan_in)) for both weight and bias."""
    dims = [(num_inputs, _HIDDEN), (_HIDDEN, _HIDDEN),
            (_HIDDEN, _HIDDEN), (_HIDDEN, 1)]
    params = {}
    keys = jax.random.split(key, 2 * len(dims))
    for idx, (fan_in, fan_out) in enumerate(dims):
        bound = 1.0 / (fan_in ** 0.5)
        kw, kb = keys[2 * idx], keys[2 * idx + 1]
        # stored as (in, out) so kernel does x @ W directly (== x @ W_torch.T)
        params[f"w{idx + 1}"] = jax.random.uniform(
            kw, (fan_in, fan_out), jnp.float32, -bound, bound)
        params[f"b{idx + 1}"] = jax.random.uniform(
            kb, (1, fan_out), jnp.float32, -bound, bound)
    return params


def reference_forward(state, params):
    h = state
    h = jnp.maximum(h @ params["w1"] + params["b1"], 0.0)
    h = jnp.maximum(h @ params["w2"] + params["b2"], 0.0)
    h = jnp.maximum(h @ params["w3"] + params["b3"], 0.0)
    return h @ params["w4"] + params["b4"]


if __name__ == "__main__":
    key = jax.random.PRNGKey(0)
    k_params, k_state = jax.random.split(key)

    batch = 50          # deliberately not a multiple of the tile -> exercises padding
    num_inputs = 32     # num_feats

    params = init_params(num_inputs, k_params)
    state = jax.random.normal(k_state, (batch, num_inputs), dtype=jnp.float32)

    ref = reference_forward(state, params)

    # Default (bf16 matmuls) path, jitted, with a 4-step grid (tile of 16).
    fwd_bf16 = jax.jit(functools.partial(one_hot_value_network, batch_tile=16))
    val_bf16 = jax.block_until_ready(fwd_bf16(state, params))
    assert val_bf16.shape == (batch, 1)
    assert jnp.allclose(val_bf16, ref, atol=5e-2, rtol=5e-2), \
        "bf16 kernel mismatch vs JAX reference"

    # Full-precision path for a tight correctness check of the fused kernel.
    val_f32 = jax.block_until_ready(
        one_hot_value_network(state, params, batch_tile=16,
                              compute_dtype=jnp.float32))
    assert val_f32.shape == (batch, 1)
    assert jnp.allclose(val_f32, ref, atol=1e-4, rtol=1e-4), \
        "f32 kernel mismatch vs JAX reference"

    print("KERNEL_OK")
</pallas_src>

<mosaic_0001>
module attributes {stable_mosaic.version = 11 : i64} {
  func.func @_mlp_kernel(%arg0: i32, %arg1: memref<16x32xbf16, #tpu.memory_space<vmem>>, %arg2: memref<32x64xbf16, #tpu.memory_space<vmem>>, %arg3: memref<1x64xf32, #tpu.memory_space<vmem>>, %arg4: memref<64x64xbf16, #tpu.memory_space<vmem>>, %arg5: memref<1x64xf32, #tpu.memory_space<vmem>>, %arg6: memref<64x64xbf16, #tpu.memory_space<vmem>>, %arg7: memref<1x64xf32, #tpu.memory_space<vmem>>, %arg8: memref<64x1xbf16, #tpu.memory_space<vmem>>, %arg9: memref<1x1xf32, #tpu.memory_space<vmem>>, %arg10: memref<16x1xf32, #tpu.memory_space<vmem>>) attributes {dimension_semantics = [#tpu.dimension_semantics<parallel>], iteration_bounds = array<i64: 4>, scalar_prefetch = 0 : i64, scratch_operands = 0 : i64, tpu.core_type = #tpu.core_type<tc>, window_params = [{transform_indices = @transform_0, window_bounds = array<i64: 16, 32>}, {pipeline_mode = #tpu.pipeline_mode<synchronous>, transform_indices = @transform_1, window_bounds = array<i64: 32, 64>}, {pipeline_mode = #tpu.pipeline_mode<synchronous>, transform_indices = @transform_2, window_bounds = array<i64: 1, 64>}, {pipeline_mode = #tpu.pipeline_mode<synchronous>, transform_indices = @transform_3, window_bounds = array<i64: 64, 64>}, {pipeline_mode = #tpu.pipeline_mode<synchronous>, transform_indices = @transform_4, window_bounds = array<i64: 1, 64>}, {pipeline_mode = #tpu.pipeline_mode<synchronous>, transform_indices = @transform_5, window_bounds = array<i64: 64, 64>}, {pipeline_mode = #tpu.pipeline_mode<synchronous>, transform_indices = @transform_6, window_bounds = array<i64: 1, 64>}, {pipeline_mode = #tpu.pipeline_mode<synchronous>, transform_indices = @transform_7, window_bounds = array<i64: 64, 1>}, {pipeline_mode = #tpu.pipeline_mode<synchronous>, transform_indices = @transform_8, window_bounds = array<i64: 1, 1>}, {transform_indices = @transform_9, window_bounds = array<i64: 16, 1>}]} {
    %c0 = arith.constant 0 : index
    %c0_0 = arith.constant 0 : index
    %0 = vector.load %arg1[%c0, %c0_0] : memref<16x32xbf16, #tpu.memory_space<vmem>>, vector<16x32xbf16>
    %c0_1 = arith.constant 0 : index
    %c0_2 = arith.constant 0 : index
    %1 = vector.load %arg2[%c0_1, %c0_2] : memref<32x64xbf16, #tpu.memory_space<vmem>>, vector<32x64xbf16>
    %cst = arith.constant dense<0.000000e+00> : vector<16x64xf32>
    %2 = tpu.matmul %0, %1, %cst {dimension_numbers = #tpu.dot_dimension_numbers<[1], [0], [0], [1], [0, 0, 1, 1], [], []>} : vector<16x32xbf16>, vector<32x64xbf16>, vector<16x64xf32> -> vector<16x64xf32>
    %c0_3 = arith.constant 0 : index
    %c0_4 = arith.constant 0 : index
    %3 = vector.load %arg3[%c0_3, %c0_4] : memref<1x64xf32, #tpu.memory_space<vmem>>, vector<1x64xf32>
    %4 = vector.broadcast %3 : vector<1x64xf32> to vector<16x64xf32>
    %5 = arith.addf %2, %4 : vector<16x64xf32>
    %cst_5 = arith.constant 0.000000e+00 : f32
    %6 = vector.broadcast %cst_5 : f32 to vector<16x64xf32>
    %7 = arith.maximumf %5, %6 : vector<16x64xf32>
    %8 = arith.truncf %7 : vector<16x64xf32> to vector<16x64xbf16>
    %c0_6 = arith.constant 0 : index
    %c0_7 = arith.constant 0 : index
    %9 = vector.load %arg4[%c0_6, %c0_7] : memref<64x64xbf16, #tpu.memory_space<vmem>>, vector<64x64xbf16>
    %cst_8 = arith.constant dense<0.000000e+00> : vector<16x64xf32>
    %10 = tpu.matmul %8, %9, %cst_8 {dimension_numbers = #tpu.dot_dimension_numbers<[1], [0], [0], [1], [0, 0, 1, 1], [], []>} : vector<16x64xbf16>, vector<64x64xbf16>, vector<16x64xf32> -> vector<16x64xf32>
    %c0_9 = arith.constant 0 : index
    %c0_10 = arith.constant 0 : index
    %11 = vector.load %arg5[%c0_9, %c0_10] : memref<1x64xf32, #tpu.memory_space<vmem>>, vector<1x64xf32>
    %12 = vector.broadcast %11 : vector<1x64xf32> to vector<16x64xf32>
    %13 = arith.addf %10, %12 : vector<16x64xf32>
    %cst_11 = arith.constant 0.000000e+00 : f32
    %14 = vector.broadcast %cst_11 : f32 to vector<16x64xf32>
    %15 = arith.maximumf %13, %14 : vector<16x64xf32>
    %16 = arith.truncf %15 : vector<16x64xf32> to vector<16x64xbf16>
    %c0_12 = arith.constant 0 : index
    %c0_13 = arith.constant 0 : index
    %17 = vector.load %arg6[%c0_12, %c0_13] : memref<64x64xbf16, #tpu.memory_space<vmem>>, vector<64x64xbf16>
    %cst_14 = arith.constant dense<0.000000e+00> : vector<16x64xf32>
    %18 = tpu.matmul %16, %17, %cst_14 {dimension_numbers = #tpu.dot_dimension_numbers<[1], [0], [0], [1], [0, 0, 1, 1], [], []>} : vector<16x64xbf16>, vector<64x64xbf16>, vector<16x64xf32> -> vector<16x64xf32>
    %c0_15 = arith.constant 0 : index
    %c0_16 = arith.constant 0 : index
    %19 = vector.load %arg7[%c0_15, %c0_16] : memref<1x64xf32, #tpu.memory_space<vmem>>, vector<1x64xf32>
    %20 = vector.broadcast %19 : vector<1x64xf32> to vector<16x64xf32>
    %21 = arith.addf %18, %20 : vector<16x64xf32>
    %cst_17 = arith.constant 0.000000e+00 : f32
    %22 = vector.broadcast %cst_17 : f32 to vector<16x64xf32>
    %23 = arith.maximumf %21, %22 : vector<16x64xf32>
    %24 = arith.truncf %23 : vector<16x64xf32> to vector<16x64xbf16>
    %c0_18 = arith.constant 0 : index
    %c0_19 = arith.constant 0 : index
    %25 = vector.load %arg8[%c0_18, %c0_19] : memref<64x1xbf16, #tpu.memory_space<vmem>>, vector<64x1xbf16>
    %cst_20 = arith.constant dense<0.000000e+00> : vector<16x1xf32>
    %26 = tpu.matmul %24, %25, %cst_20 {dimension_numbers = #tpu.dot_dimension_numbers<[1], [0], [0], [1], [0, 0, 1, 1], [], []>} : vector<16x64xbf16>, vector<64x1xbf16>, vector<16x1xf32> -> vector<16x1xf32>
    %c0_21 = arith.constant 0 : index
    %c0_22 = arith.constant 0 : index
    %27 = vector.load %arg9[%c0_21, %c0_22] : memref<1x1xf32, #tpu.memory_space<vmem>>, vector<1x1xf32>
    %28 = vector.broadcast %27 : vector<1x1xf32> to vector<16x1xf32>
    %29 = arith.addf %26, %28 : vector<16x1xf32>
    %c0_23 = arith.constant 0 : index
    %c0_24 = arith.constant 0 : index
    %30 = vector.load %arg10[%c0_23, %c0_24] : memref<16x1xf32, #tpu.memory_space<vmem>>, vector<16x1xf32>
    tpu.vector_store %arg10[%c0_23, %c0_24], %29 {strides = array<i32>} : memref<16x1xf32, #tpu.memory_space<vmem>>, vector<16x1xf32>,
    return
  }
  func.func @transform_0(%arg0: i32) -> (i32, i32) {
    %c0_i32 = arith.constant 0 : i32
    %c0_i32_0 = arith.constant 0 : i32
    return %arg0, %c0_i32 : i32, i32
  }
  func.func @transform_1(%arg0: i32) -> (i32, i32) {
    %c0_i32 = arith.constant 0 : i32
    %c0_i32_0 = arith.constant 0 : i32
    %c0_i32_1 = arith.constant 0 : i32
    return %c0_i32, %c0_i32_0 : i32, i32
  }
  func.func @transform_2(%arg0: i32) -> (i32, i32) {
    %c0_i32 = arith.constant 0 : i32
    %c0_i32_0 = arith.constant 0 : i32
    %c0_i32_1 = arith.constant 0 : i32
    return %c0_i32, %c0_i32_0 : i32, i32
  }
  func.func @transform_3(%arg0: i32) -> (i32, i32) {
    %c0_i32 = arith.constant 0 : i32
    %c0_i32_0 = arith.constant 0 : i32
    %c0_i32_1 = arith.constant 0 : i32
    return %c0_i32, %c0_i32_0 : i32, i32
  }
  func.func @transform_4(%arg0: i32) -> (i32, i32) {
    %c0_i32 = arith.constant 0 : i32
    %c0_i32_0 = arith.constant 0 : i32
    %c0_i32_1 = arith.constant 0 : i32
    return %c0_i32, %c0_i32_0 : i32, i32
  }
  func.func @transform_5(%arg0: i32) -> (i32, i32) {
    %c0_i32 = arith.constant 0 : i32
    %c0_i32_0 = arith.constant 0 : i32
    %c0_i32_1 = arith.constant 0 : i32
    return %c0_i32, %c0_i32_0 : i32, i32
  }
  func.func @transform_6(%arg0: i32) -> (i32, i32) {
    %c0_i32 = arith.constant 0 : i32
    %c0_i32_0 = arith.constant 0 : i32
    %c0_i32_1 = arith.constant 0 : i32
    return %c0_i32, %c0_i32_0 : i32, i32
  }
  func.func @transform_7(%arg0: i32) -> (i32, i32) {
    %c0_i32 = arith.constant 0 : i32
    %c0_i32_0 = arith.constant 0 : i32
    %c0_i32_1 = arith.constant 0 : i32
    return %c0_i32, %c0_i32_0 : i32, i32
  }
  func.func @transform_8(%arg0: i32) -> (i32, i32) {
    %c0_i32 = arith.constant 0 : i32
    %c0_i32_0 = arith.constant 0 : i32
    %c0_i32_1 = arith.constant 0 : i32
    return %c0_i32, %c0_i32_0 : i32, i32
  }
  func.func @transform_9(%arg0: i32) -> (i32, i32) {
    %c0_i32 = arith.constant 0 : i32
    %c0_i32_0 = arith.constant 0 : i32
    return %arg0, %c0_i32 : i32, i32
  }
}

</mosaic_0001>

<llo_original>
// kernel: one_hot_value_network.1
$region0: #{one_hot_value_network.1}
  #allocation0 [shape = 'u32[]', space=smem, size = 0x4, offset = 0x4, fixed_abs, tag = 'smem constant byte address 0x4 - core index']
  #allocation1 [shape = 'u32[144,128]{1,0:T(1,128)}', space=vmem, size = 0x12000, scoped, tag = 'internal scratch']
  #allocation2 [shape = 'f32[1,1]{1,0:T(1,128)S(1)}', space=vmem, size = 0x200, scoped, tag = 'scoped memory for one_hot_value_network.1']
  %s0 = inlined_call_operand.vmem [shape: bf16[64,32], index: 0, kind: input, shape index: {}]
  %s1 = inlined_call_operand.vmem [shape: bf16[32,64], index: 1, kind: input, shape index: {}]
  %s2 = inlined_call_operand.vmem [shape: f32[1,64], index: 2, kind: input, shape index: {}]
  %s3 = inlined_call_operand.vmem [shape: bf16[64,64], index: 3, kind: input, shape index: {}]
  %s4 = inlined_call_operand.vmem [shape: f32[1,64], index: 4, kind: input, shape index: {}]
  %s5 = inlined_call_operand.vmem [shape: bf16[64,64], index: 5, kind: input, shape index: {}]
  %s6 = inlined_call_operand.vmem [shape: f32[1,64], index: 6, kind: input, shape index: {}]
  %s7 = inlined_call_operand.vmem [shape: bf16[64,1], index: 7, kind: input, shape index: {}]
  %s8 = inlined_call_operand.<no memory space> [shape: f32[1,1], index: 8, kind: input, shape index: {}]
  %s9 = inlined_call_operand.vmem [shape: f32[64,1], index: 9, kind: output, shape index: {}]
  %s10 = sld [smem:[#allocation0]]
  $region69: #{one_hot_value_network.1} parent=0
    _
  %s12 = ssub.s32 1, %s10
  %s13 = scalar_select 0, %s12, %s10
  %v14 = vstv %s8
  %15 = vst [vmem:[#allocation2] sm:$0x1] %v14
  loop: start=0, step=1, limit=6
  $region2: #{one_hot_value_network.1} parent=0 // loop_pre_header
    _
  $region3: #{one_hot_value_network.1} parent=0 // loop_header
    %s17 = sphi 0, %s21
    %p18 = scmp.ge.s32.totalorder %s17, 6
    %s27 = sphi 0, %s29
    %s30 = sphi 0, %s27
    %s31 = sphi 0, %s30
    %s47 = sphi 0, %s31
    %s51 = sphi 0, %s51
    %s53 = sphi 0, %s51
    %s54 = sphi 0, %s53
    %s68 = sphi 0, %s54
    %s72 = sphi 0, %s72
    %s74 = sphi 0, %s72
    %s75 = sphi 0, %s74
    %s89 = sphi 0, %s75
    %s93 = sphi 0, %s93
    %s95 = sphi 0, %s93
    %s96 = sphi 0, %s95
    %s110 = sphi 0, %s96
    %s114 = sphi 0, %s114
    %s116 = sphi 0, %s114
    %s117 = sphi 0, %s116
    %s131 = sphi 0, %s117
    %s135 = sphi 0, %s135
    %s137 = sphi 0, %s135
    %s138 = sphi 0, %s137
    %s152 = sphi 0, %s138
    %s156 = sphi 0, %s156
    %s158 = sphi 0, %s156
    %s159 = sphi 0, %s158
    %s173 = sphi 0, %s159
    %s177 = sphi 0, %s177
    %s179 = sphi 0, %s177
    %s180 = sphi 0, %s179
    %s194 = sphi 0, %s180
    %s198 = sphi 0, %s198
    %s200 = sphi 0, %s198
    %s201 = sphi 0, %s200
    %s215 = sphi 0, %s201
    %s221 = sphi 0, %s223
    %s224 = sphi 0, %s221
    %s225 = sphi 0, %s224
    %s241 = sphi 0, %s225
  $region4: #{one_hot_value_network.1} parent=0 // loop_header_branch
    %20 = sbr.rel (%p18) target = $region8
  $region5: #{one_hot_value_network.1} parent=0 // loop_body
    %s22 = ssub.s32 %s17, 1
    %s23 = ssub.s32 %s17, 2
    %s24 = sadd.s32 %s17, 1
    %s25 = ssub.s32 %s17, %s24
    %p26 = scmp.eq.s32.totalorder %s25, 0
    %s28 = sadd.s32 %s27, 1
    %s29 = scalar_select %p26, %s27, %s28
    %p32 = pneg %p26
    %p33 = scmp.eq.s32.totalorder %s17, 3
    %p34 = por %p32, %p33
    %p35 = scmp.ne.s32.totalorder %s27, %s30
    %p36 = scmp.eq.s32.totalorder %s17, 0
    %p37 = por %p35, %p36
    %p38 = scmp.ne.s32.totalorder %s27, %s30
    %p39 = scmp.eq.s32.totalorder %s22, 3
    %p40 = por %p38, %p39
    %p41 = scmp.ne.s32.totalorder %s30, %s31
    %p42 = scmp.eq.s32.totalorder %s22, 0
    %p43 = por %p41, %p42
    %p44 = scmp.ne.s32.totalorder %s30, %s31
    %p45 = scmp.eq.s32.totalorder %s23, 3
    %p46 = por %p44, %p45
    %p48 = scmp.ne.s32.totalorder %s31, %s47
    %p49 = scmp.eq.s32.totalorder %s23, 0
    %p50 = por %p48, %p49
    %s52 = sadd.s32 %s51, 1
    %p55 = scmp.eq.s32.totalorder %s17, 3
    %p56 = scmp.ne.s32.totalorder %s51, %s53
    %p57 = scmp.eq.s32.totalorder %s17, 0
    %p58 = por %p56, %p57
    %p59 = scmp.ne.s32.totalorder %s51, %s53
    %p60 = scmp.eq.s32.totalorder %s22, 3
    %p61 = por %p59, %p60
    %p62 = scmp.ne.s32.totalorder %s53, %s54
    %p63 = scmp.eq.s32.totalorder %s22, 0
    %p64 = por %p62, %p63
    %p65 = scmp.ne.s32.totalorder %s53, %s54
    %p66 = scmp.eq.s32.totalorder %s23, 3
    %p67 = por %p65, %p66
    %p69 = scmp.ne.s32.totalorder %s54, %s68
    %p70 = scmp.eq.s32.totalorder %s23, 0
    %p71 = por %p69, %p70
    %s73 = sadd.s32 %s72, 1
    %p76 = scmp.eq.s32.totalorder %s17, 3
    %p77 = scmp.ne.s32.totalorder %s72, %s74
    %p78 = scmp.eq.s32.totalorder %s17, 0
    %p79 = por %p77, %p78
    %p80 = scmp.ne.s32.totalorder %s72, %s74
    %p81 = scmp.eq.s32.totalorder %s22, 3
    %p82 = por %p80, %p81
    %p83 = scmp.ne.s32.totalorder %s74, %s75
    %p84 = scmp.eq.s32.totalorder %s22, 0
    %p85 = por %p83, %p84
    %p86 = scmp.ne.s32.totalorder %s74, %s75
    %p87 = scmp.eq.s32.totalorder %s23, 3
    %p88 = por %p86, %p87
    %p90 = scmp.ne.s32.totalorder %s75, %s89
    %p91 = scmp.eq.s32.totalorder %s23, 0
    %p92 = por %p90, %p91
    %s94 = sadd.s32 %s93, 1
    %p97 = scmp.eq.s32.totalorder %s17, 3
    %p98 = scmp.ne.s32.totalorder %s93, %s95
    %p99 = scmp.eq.s32.totalorder %s17, 0
    %p100 = por %p98, %p99
    %p101 = scmp.ne.s32.totalorder %s93, %s95
    %p102 = scmp.eq.s32.totalorder %s22, 3
    %p103 = por %p101, %p102
    %p104 = scmp.ne.s32.totalorder %s95, %s96
    %p105 = scmp.eq.s32.totalorder %s22, 0
    %p106 = por %p104, %p105
    %p107 = scmp.ne.s32.totalorder %s95, %s96
    %p108 = scmp.eq.s32.totalorder %s23, 3
    %p109 = por %p107, %p108
    %p111 = scmp.ne.s32.totalorder %s96, %s110
    %p112 = scmp.eq.s32.totalorder %s23, 0
    %p113 = por %p111, %p112
    %s115 = sadd.s32 %s114, 1
    %p118 = scmp.eq.s32.totalorder %s17, 3
    %p119 = scmp.ne.s32.totalorder %s114, %s116
    %p120 = scmp.eq.s32.totalorder %s17, 0
    %p121 = por %p119, %p120
    %p122 = scmp.ne.s32.totalorder %s114, %s116
    %p123 = scmp.eq.s32.totalorder %s22, 3
    %p124 = por %p122, %p123
    %p125 = scmp.ne.s32.totalorder %s116, %s117
    %p126 = scmp.eq.s32.totalorder %s22, 0
    %p127 = por %p125, %p126
    %p128 = scmp.ne.s32.totalorder %s116, %s117
    %p129 = scmp.eq.s32.totalorder %s23, 3
    %p130 = por %p128, %p129
    %p132 = scmp.ne.s32.totalorder %s117, %s131
    %p133 = scmp.eq.s32.totalorder %s23, 0
    %p134 = por %p132, %p133
    %s136 = sadd.s32 %s135, 1
    %p139 = scmp.eq.s32.totalorder %s17, 3
    %p140 = scmp.ne.s32.totalorder %s135, %s137
    %p141 = scmp.eq.s32.totalorder %s17, 0
    %p142 = por %p140, %p141
    %p143 = scmp.ne.s32.totalorder %s135, %s137
    %p144 = scmp.eq.s32.totalorder %s22, 3
    %p145 = por %p143, %p144
    %p146 = scmp.ne.s32.totalorder %s137, %s138
    %p147 = scmp.eq.s32.totalorder %s22, 0
    %p148 = por %p146, %p147
    %p149 = scmp.ne.s32.totalorder %s137, %s138
    %p150 = scmp.eq.s32.totalorder %s23, 3
    %p151 = por %p149, %p150
    %p153 = scmp.ne.s32.totalorder %s138, %s152
    %p154 = scmp.eq.s32.totalorder %s23, 0
    %p155 = por %p153, %p154
    %s157 = sadd.s32 %s156, 1
    %p160 = scmp.eq.s32.totalorder %s17, 3
    %p161 = scmp.ne.s32.totalorder %s156, %s158
    %p162 = scmp.eq.s32.totalorder %s17, 0
    %p163 = por %p161, %p162
    %p164 = scmp.ne.s32.totalorder %s156, %s158
    %p165 = scmp.eq.s32.totalorder %s22, 3
    %p166 = por %p164, %p165
    %p167 = scmp.ne.s32.totalorder %s158, %s159
    %p168 = scmp.eq.s32.totalorder %s22, 0
    %p169 = por %p167, %p168
    %p170 = scmp.ne.s32.totalorder %s158, %s159
    %p171 = scmp.eq.s32.totalorder %s23, 3
    %p172 = por %p170, %p171
    %p174 = scmp.ne.s32.totalorder %s159, %s173
    %p175 = scmp.eq.s32.totalorder %s23, 0
    %p176 = por %p174, %p175
    %s178 = sadd.s32 %s177, 1
    %p181 = scmp.eq.s32.totalorder %s17, 3
    %p182 = scmp.ne.s32.totalorder %s177, %s179
    %p183 = scmp.eq.s32.totalorder %s17, 0
    %p184 = por %p182, %p183
    %p185 = scmp.ne.s32.totalorder %s177, %s179
    %p186 = scmp.eq.s32.totalorder %s22, 3
    %p187 = por %p185, %p186
    %p188 = scmp.ne.s32.totalorder %s179, %s180
    %p189 = scmp.eq.s32.totalorder %s22, 0
    %p190 = por %p188, %p189
    %p191 = scmp.ne.s32.totalorder %s179, %s180
    %p192 = scmp.eq.s32.totalorder %s23, 3
    %p193 = por %p191, %p192
    %p195 = scmp.ne.s32.totalorder %s180, %s194
    %p196 = scmp.eq.s32.totalorder %s23, 0
    %p197 = por %p195, %p196
    %s199 = sadd.s32 %s198, 1
    %p202 = scmp.eq.s32.totalorder %s17, 3
    %p203 = scmp.ne.s32.totalorder %s198, %s200
    %p204 = scmp.eq.s32.totalorder %s17, 0
    %p205 = por %p203, %p204
    %p206 = scmp.ne.s32.totalorder %s198, %s200
    %p207 = scmp.eq.s32.totalorder %s22, 3
    %p208 = por %p206, %p207
    %p209 = scmp.ne.s32.totalorder %s200, %s201
    %p210 = scmp.eq.s32.totalorder %s22, 0
    %p211 = por %p209, %p210
    %p212 = scmp.ne.s32.totalorder %s200, %s201
    %p213 = scmp.eq.s32.totalorder %s23, 3
    %p214 = por %p212, %p213
    %p216 = scmp.ne.s32.totalorder %s201, %s215
    %p217 = scmp.eq.s32.totalorder %s23, 0
    %p218 = por %p216, %p217
    %s219 = ssub.s32 %s17, %s24
    %p220 = scmp.eq.s32.totalorder %s219, 0
    %s222 = sadd.s32 %s221, 1
    %s223 = scalar_select %p220, %s221, %s222
    %p226 = pneg %p220
    %p227 = scmp.eq.s32.totalorder %s17, 3
    %p228 = por %p226, %p227
    %p229 = scmp.ne.s32.totalorder %s221, %s224
    %p230 = scmp.eq.s32.totalorder %s17, 0
    %p231 = por %p229, %p230
    %p232 = scmp.ne.s32.totalorder %s221, %s224
    %p233 = scmp.eq.s32.totalorder %s22, 3
    %p234 = por %p232, %p233
    %p235 = scmp.ne.s32.totalorder %s224, %s225
    %p236 = scmp.eq.s32.totalorder %s22, 0
    %p237 = por %p235, %p236
    %p238 = scmp.ne.s32.totalorder %s224, %s225
    %p239 = scmp.eq.s32.totalorder %s23, 3
    %p240 = por %p238, %p239
    %p242 = scmp.ne.s32.totalorder %s225, %s241
    %p243 = scmp.eq.s32.totalorder %s23, 0
    %p244 = por %p242, %p243
    %p245 = scmp.le.s32.totalorder 1, %s17
    %p246 = scmp.lt.s32.totalorder %s17, 5
    %p247 = pnand %p245, %p246
    %p248 = pneg %p247
    // Predicated region
    $region9: #{one_hot_value_network.1} parent=5 // pred_check
      _
    $region10: #{one_hot_value_network.1} parent=5 // pred_check_branch
      %250 = sbr.rel (%p247) target = $region12
    $region11: #{one_hot_value_network.1} parent=5 // pred_region
      %s251 = ssub.s32 %s17, 1
      // Predicated region
      $region13: #{one_hot_value_network.1} parent=11 // pred_check
        %p252 = pneg %p64
      $region14: #{one_hot_value_network.1} parent=11 // pred_check_branch
        %254 = sbr.rel (%p252) target = $region16
      $region15: #{one_hot_value_network.1} parent=11 // pred_region
        _
      $region16: #{one_hot_value_network.1} parent=11 // pred_fallthru
        _
      // Predicated region
      $region17: #{one_hot_value_network.1} parent=11 // pred_check
        %p255 = pneg %p85
      $region18: #{one_hot_value_network.1} parent=11 // pred_check_branch
        %257 = sbr.rel (%p255) target = $region20
      $region19: #{one_hot_value_network.1} parent=11 // pred_region
        _
      $region20: #{one_hot_value_network.1} parent=11 // pred_fallthru
        _
      // Predicated region
      $region21: #{one_hot_value_network.1} parent=11 // pred_check
        %p258 = pneg %p106
      $region22: #{one_hot_value_network.1} parent=11 // pred_check_branch
        %260 = sbr.rel (%p258) target = $region24
      $region23: #{one_hot_value_network.1} parent=11 // pred_region
        _
      $region24: #{one_hot_value_network.1} parent=11 // pred_fallthru
        _
      // Predicated region
      $region25: #{one_hot_value_network.1} parent=11 // pred_check
        %p261 = pneg %p127
      $region26: #{one_hot_value_network.1} parent=11 // pred_check_branch
        %263 = sbr.rel (%p261) target = $region28
      $region27: #{one_hot_value_network.1} parent=11 // pred_region
        _
      $region28: #{one_hot_value_network.1} parent=11 // pred_fallthru
        _
      // Predicated region
      $region29: #{one_hot_value_network.1} parent=11 // pred_check
        %p264 = pneg %p148
      $region30: #{one_hot_value_network.1} parent=11 // pred_check_branch
        %266 = sbr.rel (%p264) target = $region32
      $region31: #{one_hot_value_network.1} parent=11 // pred_region
        _
      $region32: #{one_hot_value_network.1} parent=11 // pred_fallthru
        _
      // Predicated region
      $region33: #{one_hot_value_network.1} parent=11 // pred_check
        %p267 = pneg %p169
      $region34: #{one_hot_value_network.1} parent=11 // pred_check_branch
        %269 = sbr.rel (%p267) target = $region36
      $region35: #{one_hot_value_network.1} parent=11 // pred_region
        _
      $region36: #{one_hot_value_network.1} parent=11 // pred_fallthru
        _
      // Predicated region
      $region37: #{one_hot_value_network.1} parent=11 // pred_check
        %p270 = pneg %p190
      $region38: #{one_hot_value_network.1} parent=11 // pred_check_branch
        %272 = sbr.rel (%p270) target = $region40
      $region39: #{one_hot_value_network.1} parent=11 // pred_region
        _
      $region40: #{one_hot_value_network.1} parent=11 // pred_fallthru
        _
      // Predicated region
      $region41: #{one_hot_value_network.1} parent=11 // pred_check
        %p273 = pneg %p211
      $region42: #{one_hot_value_network.1} parent=11 // pred_check_branch
        %275 = sbr.rel (%p273) target = $region44
      $region43: #{one_hot_value_network.1} parent=11 // pred_region
        _
      $region44: #{one_hot_value_network.1} parent=11 // pred_fallthru
        _
    $region12: #{one_hot_value_network.1} parent=5 // pred_fallthru
      _
    %p276 = scmp.lt.s32.totalorder %s17, 4
    // Predicated region
    $region45: #{one_hot_value_network.1} parent=5 // pred_check
      %p277 = pneg %p276
    $region46: #{one_hot_value_network.1} parent=5 // pred_check_branch
      %279 = sbr.rel (%p277) target = $region48
    $region47: #{one_hot_value_network.1} parent=5 // pred_region
      // Predicated region
      $region49: #{one_hot_value_network.1} parent=47 // pred_check
        %p280 = pneg %p37
      $region50: #{one_hot_value_network.1} parent=47 // pred_check_branch
        %282 = sbr.rel (%p280) target = $region52
      $region51: #{one_hot_value_network.1} parent=47 // pred_region
        %s283 = smul.u32 2, %s17
        %p284 = scmp.lt.s32.totalorder %s283, 7
        %s285 = scalar_select %p284, %s283, 7
        %s286 = smul.addr %s285, 4
        %s287 = scalar_lea.vmem %s0, %s286
        %s288 = smul.u32 2, %s17
      $region52: #{one_hot_value_network.1} parent=47 // pred_fallthru
        _
    $region48: #{one_hot_value_network.1} parent=5 // pred_fallthru
      _
    %p289 = scmp.le.s32.totalorder 1, %s17
    %p290 = scmp.lt.s32.totalorder %s17, 5
    %p291 = pnand %p289, %p290
    %p292 = pneg %p291
    // Predicated region
    $region53: #{one_hot_value_network.1} parent=5 // pred_check
      _
    $region54: #{one_hot_value_network.1} parent=5 // pred_check_branch
      %294 = sbr.rel (%p291) target = $region56
    $region55: #{one_hot_value_network.1} parent=5 // pred_region
      %s295 = ssub.s32 %s17, 1
      %s296 = smul.u32 2, %s22
      %p297 = scmp.lt.s32.totalorder %s296, 7
      %s298 = scalar_select %p297, %s296, 7
      %s299 = smul.addr %s298, 4
      %s300 = scalar_lea.vmem %s0, %s299
      %p301 = pneg %p43
      %p302 = pneg %p40
      %p303 = pneg %p64
      %p304 = pneg %p61
      %p305 = pneg %p85
      %p306 = pneg %p82
      %p307 = pneg %p106
      %p308 = pneg %p103
      %p309 = pneg %p127
      %p310 = pneg %p124
      %p311 = pneg %p148
      %p312 = pneg %p145
      %p313 = pneg %p169
      %p314 = pneg %p166
      %p315 = pneg %p190
      %p316 = pneg %p187
      %p317 = pneg %p211
      %p318 = pneg %p208
      %p319 = pneg %p237
      %p320 = pneg %p234
      %s321 = smul.u32 2, %s22
      %p322 = scmp.lt.s32.totalorder %s321, 7
      %s323 = scalar_select %p322, %s321, 7
      %s324 = smul.addr %s323, 8
      %s325 = scalar_lea.vmem %s9, %s324
      %s326 = smul.u32 2, %s22
      %p327 = scmp.lt.s32.totalorder %s326, 7
      %s328 = scalar_select %p327, %s326, 7
      %s329 = smul.addr %s328, 4
      %s330 = scalar_lea.vmem %s0, %s329
      %s331 = smul.u32 2, %s22
      %s332 = smul.u32 2, %s22
      %p333 = scmp.lt.s32.totalorder %s332, 7
      %s334 = scalar_select %p333, %s332, 7
      %s335 = smul.addr %s334, 8
      %s336 = scalar_lea.vmem %s9, %s335
      %s337 = smul.u32 2, %s22
      %v339 = vld [vmem:[%s330] sm:$0xf]
      %v340 = vld [vmem:[%s330 + $0x4] sm:$0xf]
      %v341 = vld [vmem:[%s1] sm:$0xf]
      %v342 = vld [vmem:[%s1 + $0x4] sm:$0xf]
      %v343 = vld [vmem:[%s1 + $0x8] sm:$0xf]
      %v344 = vld [vmem:[%s1 + $0xc] sm:$0xf]
      %v345 = vld [vmem:[%s2] sm:$0x1]
      %v347 = vlaneseq
      %v348 = vshrl.u32 %v347, 7
      %v349 = vsub.s32 0, %v348
      %v350 = vrot.slane %v345, %v349
      %v354 = vunpack.c.l.b16 %v339
      %v355 = vunpack.c.l.b16 %v340
      %v356 = vpack.c.b16 %v355, %v354
      %v361 = vunpack.c.l.b16 %v341
      %v362 = vunpack.c.l.b16 %v342
      %v363 = vunpack.c.l.b16 %v343
      %v364 = vunpack.c.l.b16 %v344
      %v365 = vpack.c.b16 %v362, %v361
      %v366 = vpack.c.b16 %v364, %v363
      %vm369 = vcmask 261120
      %v371 = vsel %vm369, %v356, 0
      %373 = vmatprep.subr.bf16.mxu0 0
      %374 = vmatpush1.bf16.msra.mxu0 0
      %375 = vmatprep.subr.bf16.mxu0 0
      %376 = vmatpush1.bf16.msra.mxu0 0
      %377 = vmatprep.subr.bf16.mxu0 0
      %378 = vmatpush1.bf16.msra.mxu0 0
      %379 = vmatprep.subr.bf16.mxu0 0
      %380 = vmatpush1.bf16.msra.mxu0 0
      %381 = vmatprep.subr.bf16.mxu0 0
      %382 = vmatpush1.bf16.msra.mxu0 0
      %383 = vmatprep.subr.bf16.mxu0 0
      %384 = vmatpush1.bf16.msra.mxu0 0
      %385 = vmatprep.subr.bf16.mxu0 0
      %386 = vmatpush1.bf16.msra.mxu0 %v366
      %387 = vmatprep.subr.bf16.mxu0 0
      %388 = vmatpush1.bf16.msra.mxu0 %v365
      %389 = vmatprep.subr.bf16.mxu0 0
      %390 = vmatpush2.bf16.msra.mxu0 0
      %391 = vmatprep.subr.bf16.mxu0 0
      %392 = vmatpush2.bf16.msra.mxu0 0
      %393 = vmatprep.subr.bf16.mxu0 0
      %394 = vmatpush2.bf16.msra.mxu0 0
      %395 = vmatprep.subr.bf16.mxu0 0
      %396 = vmatpush2.bf16.msra.mxu0 0
      %397 = vmatprep.subr.bf16.mxu0 0
      %398 = vmatpush2.bf16.msra.mxu0 0
      %399 = vmatprep.subr.bf16.mxu0 0
      %400 = vmatpush2.bf16.msra.mxu0 0
      %401 = vmatprep.subr.bf16.mxu0 0
      %402 = vmatpush2.bf16.msra.mxu0 0
      %403 = vmatprep.subr.bf16.mxu0 0
      %404 = vmatpush2.bf16.msra.mxu0 0
      %405 = vmatprep.mubr.bf16.mxu0 0
      %406 = vmatmul.mubr.bf16.gmra.mxu0 %v371
      %v407 = vpop.f32.mrf.mxu0
      %v408 = vadd.f32 %v350, %v407
      %v409 = vpop.f32.mrf.mxu0
      %v410 = vpop.f32.mrf.mxu0
      %v411 = vadd.f32 %v350, %v410
      %v412 = vpop.f32.mrf.mxu0
      %413 = vdwg.mxu0
      %v414 = vmax.f32 %v408, 0.0
      %v415 = vmax.f32 %v411, 0.0
      %v416 = vpack.c.bf16 %v415, %v414
      %v417 = vld [vmem:[%s3] sm:$0xf]
      %v418 = vld [vmem:[%s3 + $0x4] sm:$0xf]
      %v419 = vld [vmem:[%s3 + $0x8] sm:$0xf]
      %v420 = vld [vmem:[%s3 + $0xc] sm:$0xf]
      %v421 = vld [vmem:[%s3 + $0x10] sm:$0xf]
      %v422 = vld [vmem:[%s3 + $0x14] sm:$0xf]
      %v423 = vld [vmem:[%s3 + $0x18] sm:$0xf]
      %v424 = vld [vmem:[%s3 + $0x1c] sm:$0xf]
      %v425 = vld [vmem:[%s4] sm:$0x1]
      %v427 = vlaneseq
      %v428 = vshrl.u32 %v427, 7
      %v429 = vsub.s32 0, %v428
      %v430 = vrot.slane %v425, %v429
      %v440 = vunpack.c.l.b16 %v417
      %v441 = vunpack.c.l.b16 %v418
      %v442 = vunpack.c.l.b16 %v419
      %v443 = vunpack.c.l.b16 %v420
      %v444 = vunpack.c.l.b16 %v421
      %v445 = vunpack.c.l.b16 %v422
      %v446 = vunpack.c.l.b16 %v423
      %v447 = vunpack.c.l.b16 %v424
      %v448 = vpack.c.b16 %v441, %v440
      %v449 = vpack.c.b16 %v443, %v442
      %v450 = vpack.c.b16 %v445, %v444
      %v451 = vpack.c.b16 %v447, %v446
      %vm456 = vcmask 523264
      %v458 = vsel %vm456, %v416, 0
      %460 = vmatprep.subr.bf16.mxu0 0
      %461 = vmatpush1.bf16.msra.mxu0 0
      %462 = vmatprep.subr.bf16.mxu0 0
      %463 = vmatpush1.bf16.msra.mxu0 0
      %464 = vmatprep.subr.bf16.mxu0 0
      %465 = vmatpush1.bf16.msra.mxu0 0
      %466 = vmatprep.subr.bf16.mxu0 0
      %467 = vmatpush1.bf16.msra.mxu0 0
      %468 = vmatprep.subr.bf16.mxu0 0
      %469 = vmatpush1.bf16.msra.mxu0 %v451
      %470 = vmatprep.subr.bf16.mxu0 0
      %471 = vmatpush1.bf16.msra.mxu0 %v450
      %472 = vmatprep.subr.bf16.mxu0 0
      %473 = vmatpush1.bf16.msra.mxu0 %v449
      %474 = vmatprep.subr.bf16.mxu0 0
      %475 = vmatpush1.bf16.msra.mxu0 %v448
      %476 = vmatprep.subr.bf16.mxu0 0
      %477 = vmatpush2.bf16.msra.mxu0 0
      %478 = vmatprep.subr.bf16.mxu0 0
      %479 = vmatpush2.bf16.msra.mxu0 0
      %480 = vmatprep.subr.bf16.mxu0 0
      %481 = vmatpush2.bf16.msra.mxu0 0
      %482 = vmatprep.subr.bf16.mxu0 0
      %483 = vmatpush2.bf16.msra.mxu0 0
      %484 = vmatprep.subr.bf16.mxu0 0
      %485 = vmatpush2.bf16.msra.mxu0 0
      %486 = vmatprep.subr.bf16.mxu0 0
      %487 = vmatpush2.bf16.msra.mxu0 0
      %488 = vmatprep.subr.bf16.mxu0 0
      %489 = vmatpush2.bf16.msra.mxu0 0
      %490 = vmatprep.subr.bf16.mxu0 0
      %491 = vmatpush2.bf16.msra.mxu0 0
      %492 = vmatprep.mubr.bf16.mxu0 0
      %493 = vmatmul.mubr.bf16.gmra.mxu0 %v458
      %v494 = vpop.f32.mrf.mxu0
      %v495 = vadd.f32 %v430, %v494
      %v496 = vpop.f32.mrf.mxu0
      %v497 = vpop.f32.mrf.mxu0
      %v498 = vadd.f32 %v430, %v497
      %v499 = vpop.f32.mrf.mxu0
      %500 = vdwg.mxu0
      %v501 = vmax.f32 %v495, 0.0
      %v502 = vmax.f32 %v498, 0.0
      %v503 = vpack.c.bf16 %v502, %v501
      %v504 = vld [vmem:[%s5] sm:$0xf]
      %v505 = vld [vmem:[%s5 + $0x4] sm:$0xf]
      %v506 = vld [vmem:[%s5 + $0x8] sm:$0xf]
      %v507 = vld [vmem:[%s5 + $0xc] sm:$0xf]
      %v508 = vld [vmem:[%s5 + $0x10] sm:$0xf]
      %v509 = vld [vmem:[%s5 + $0x14] sm:$0xf]
      %v510 = vld [vmem:[%s5 + $0x18] sm:$0xf]
      %v511 = vld [vmem:[%s5 + $0x1c] sm:$0xf]
      %v512 = vld [vmem:[%s6] sm:$0x1]
      %v514 = vlaneseq
      %v515 = vshrl.u32 %v514, 7
      %v516 = vsub.s32 0, %v515
      %v517 = vrot.slane %v512, %v516
      %v527 = vunpack.c.l.b16 %v504
      %v528 = vunpack.c.l.b16 %v505
      %v529 = vunpack.c.l.b16 %v506
      %v530 = vunpack.c.l.b16 %v507
      %v531 = vunpack.c.l.b16 %v508
      %v532 = vunpack.c.l.b16 %v509
      %v533 = vunpack.c.l.b16 %v510
      %v534 = vunpack.c.l.b16 %v511
      %v535 = vpack.c.b16 %v528, %v527
      %v536 = vpack.c.b16 %v530, %v529
      %v537 = vpack.c.b16 %v532, %v531
      %v538 = vpack.c.b16 %v534, %v533
      %v544 = vsel %vm456, %v503, 0
      %546 = vmatprep.subr.bf16.mxu0 0
      %547 = vmatpush1.bf16.msra.mxu0 0
      %548 = vmatprep.subr.bf16.mxu0 0
      %549 = vmatpush1.bf16.msra.mxu0 0
      %550 = vmatprep.subr.bf16.mxu0 0
      %551 = vmatpush1.bf16.msra.mxu0 0
      %552 = vmatprep.subr.bf16.mxu0 0
      %553 = vmatpush1.bf16.msra.mxu0 0
      %554 = vmatprep.subr.bf16.mxu0 0
      %555 = vmatpush1.bf16.msra.mxu0 %v538
      %556 = vmatprep.subr.bf16.mxu0 0
      %557 = vmatpush1.bf16.msra.mxu0 %v537
      %558 = vmatprep.subr.bf16.mxu0 0
      %559 = vmatpush1.bf16.msra.mxu0 %v536
      %560 = vmatprep.subr.bf16.mxu0 0
      %561 = vmatpush1.bf16.msra.mxu0 %v535
      %562 = vmatprep.subr.bf16.mxu0 0
      %563 = vmatpush2.bf16.msra.mxu0 0
      %564 = vmatprep.subr.bf16.mxu0 0
      %565 = vmatpush2.bf16.msra.mxu0 0
      %566 = vmatprep.subr.bf16.mxu0 0
      %567 = vmatpush2.bf16.msra.mxu0 0
      %568 = vmatprep.subr.bf16.mxu0 0
      %569 = vmatpush2.bf16.msra.mxu0 0
      %570 = vmatprep.subr.bf16.mxu0 0
      %571 = vmatpush2.bf16.msra.mxu0 0
      %572 = vmatprep.subr.bf16.mxu0 0
      %573 = vmatpush2.bf16.msra.mxu0 0
      %574 = vmatprep.subr.bf16.mxu0 0
      %575 = vmatpush2.bf16.msra.mxu0 0
      %576 = vmatprep.subr.bf16.mxu0 0
      %577 = vmatpush2.bf16.msra.mxu0 0
      %578 = vmatprep.mubr.bf16.mxu0 0
      %579 = vmatmul.mubr.bf16.gmra.mxu0 %v544
      %v580 = vpop.f32.mrf.mxu0
      %v581 = vadd.f32 %v517, %v580
      %v582 = vpop.f32.mrf.mxu0
      %v583 = vpop.f32.mrf.mxu0
      %v584 = vadd.f32 %v517, %v583
      %v585 = vpop.f32.mrf.mxu0
      %586 = vdwg.mxu0
      %v587 = vmax.f32 %v581, 0.0
      %v588 = vmax.f32 %v584, 0.0
      %v589 = vpack.c.bf16 %v588, %v587
      %v590 = vld [vmem:[%s7] sm:$0xf]
      %v591 = vld [vmem:[%s7 + $0x4] sm:$0xf]
      %v592 = vld [vmem:[%s7 + $0x8] sm:$0xf]
      %v593 = vld [vmem:[%s7 + $0xc] sm:$0xf]
      %v594 = vld [vmem:[%s7 + $0x10] sm:$0xf]
      %v595 = vld [vmem:[%s7 + $0x14] sm:$0xf]
      %v596 = vld [vmem:[%s7 + $0x18] sm:$0xf]
      %v597 = vld [vmem:[%s7 + $0x1c] sm:$0xf]
      %v598 = vld [vmem:[#allocation2] sm:$0x1]
      %v600 = vlaneseq
      %v601 = vshrl.u32 %v600, 7
      %v602 = vsub.s32 0, %v601
      %v603 = vrot.slane %v598, %v602
      %v613 = vunpack.c.l.b16 %v590
      %v614 = vunpack.c.l.b16 %v591
      %v615 = vunpack.c.l.b16 %v592
      %v616 = vunpack.c.l.b16 %v593
      %v617 = vunpack.c.l.b16 %v594
      %v618 = vunpack.c.l.b16 %v595
      %v619 = vunpack.c.l.b16 %v596
      %v620 = vunpack.c.l.b16 %v597
      %v621 = vpack.c.b16 %v614, %v613
      %v622 = vpack.c.b16 %v616, %v615
      %v623 = vpack.c.b16 %v618, %v617
      %v624 = vpack.c.b16 %v620, %v619
      %v630 = vsel %vm456, %v589, 0
      %632 = vmatprep.subr.bf16.mxu0 0
      %633 = vmatpush1.bf16.msra.mxu0 0
      %634 = vmatprep.subr.bf16.mxu0 0
      %635 = vmatpush1.bf16.msra.mxu0 0
      %636 = vmatprep.subr.bf16.mxu0 0
      %637 = vmatpush1.bf16.msra.mxu0 0
      %638 = vmatprep.subr.bf16.mxu0 0
      %639 = vmatpush1.bf16.msra.mxu0 0
      %640 = vmatprep.subr.bf16.mxu0 0
      %641 = vmatpush1.bf16.msra.mxu0 %v624
      %642 = vmatprep.subr.bf16.mxu0 0
      %643 = vmatpush1.bf16.msra.mxu0 %v623
      %644 = vmatprep.subr.bf16.mxu0 0
      %645 = vmatpush1.bf16.msra.mxu0 %v622
      %646 = vmatprep.subr.bf16.mxu0 0
      %647 = vmatpush1.bf16.msra.mxu0 %v621
      %648 = vmatprep.subr.bf16.mxu0 0
      %649 = vmatpush2.bf16.msra.mxu0 0
      %650 = vmatprep.subr.bf16.mxu0 0
      %651 = vmatpush2.bf16.msra.mxu0 0
      %652 = vmatprep.subr.bf16.mxu0 0
      %653 = vmatpush2.bf16.msra.mxu0 0
      %654 = vmatprep.subr.bf16.mxu0 0
      %655 = vmatpush2.bf16.msra.mxu0 0
      %656 = vmatprep.subr.bf16.mxu0 0
      %657 = vmatpush2.bf16.msra.mxu0 0
      %658 = vmatprep.subr.bf16.mxu0 0
      %659 = vmatpush2.bf16.msra.mxu0 0
      %660 = vmatprep.subr.bf16.mxu0 0
      %661 = vmatpush2.bf16.msra.mxu0 0
      %662 = vmatprep.subr.bf16.mxu0 0
      %663 = vmatpush2.bf16.msra.mxu0 0
      %664 = vmatprep.mubr.bf16.mxu0 0
      %665 = vmatmul.mubr.bf16.gmra.mxu0 %v630
      %v666 = vpop.f32.mrf.mxu0
      %v667 = vadd.f32 %v603, %v666
      %v668 = vpop.f32.mrf.mxu0
      %v669 = vpop.f32.mrf.mxu0
      %v670 = vadd.f32 %v603, %v669
      %v671 = vpop.f32.mrf.mxu0
      %672 = vdwg.mxu0
      %vm673 = vcmask 7168
      %674 = vst.msk [vmem:[%s336] sm:$0xff] %vm673, %v667
      %675 = vst.msk [vmem:[%s336 + $0x8] sm:$0xff] %vm673, %v670
      %s676 = smul.u32 2, %s22
      %p677 = scmp.lt.s32.totalorder %s676, 7
      %s678 = scalar_select %p677, %s676, 7
      %s679 = smul.addr %s678, 8
      %s680 = scalar_lea.vmem %s9, %s679
      // Predicated region
      $region57: #{one_hot_value_network.1} parent=55 // pred_check
        %p681 = pneg %p234
      $region58: #{one_hot_value_network.1} parent=55 // pred_check_branch
        %683 = sbr.rel (%p681) target = $region60
      $region59: #{one_hot_value_network.1} parent=55 // pred_region
        %s684 = smul.u32 2, %s22
      $region60: #{one_hot_value_network.1} parent=55 // pred_fallthru
        _
    $region56: #{one_hot_value_network.1} parent=5 // pred_fallthru
      _
    %p685 = scmp.le.s32.totalorder 2, %s17
    // Predicated region
    $region61: #{one_hot_value_network.1} parent=5 // pred_check
      %p686 = pneg %p685
    $region62: #{one_hot_value_network.1} parent=5 // pred_check_branch
      %688 = sbr.rel (%p686) target = $region64
    $region63: #{one_hot_value_network.1} parent=5 // pred_region
      %s689 = ssub.s32 %s17, 2
      // Predicated region
      $region65: #{one_hot_value_network.1} parent=63 // pred_check
        %p690 = pneg %p240
      $region66: #{one_hot_value_network.1} parent=63 // pred_check_branch
        %692 = sbr.rel (%p690) target = $region68
      $region67: #{one_hot_value_network.1} parent=63 // pred_region
        %s693 = smul.u32 2, %s23
        %p694 = scmp.lt.s32.totalorder %s693, 7
        %s695 = scalar_select %p694, %s693, 7
        %s696 = smul.addr %s695, 8
        %s697 = scalar_lea.vmem %s9, %s696
      $region68: #{one_hot_value_network.1} parent=63 // pred_fallthru
        _
    $region64: #{one_hot_value_network.1} parent=5 // pred_fallthru
      _
  $region6: #{one_hot_value_network.1} parent=0 // loop_footer
    %s21 = sadd.s32 1, %s17
  $region7: #{one_hot_value_network.1} parent=0 // loop_footer_branch
    %16 = sbr.rel target = $region3
  $region8: #{one_hot_value_network.1} parent=0 // loop_exit
    _

</llo_original>
